<compile_context>
chip_gen: v7x
topology: tpu7x:2x2x1
jax: 0.10.0
libtpu: 0.0.40
codegen_flags: <defaults>
</compile_context>

<pallas_src>
import math

import jax
import jax.numpy as jnp
from jax import lax
from jax.experimental import pallas as pl
from jax.experimental.pallas import tpu as pltpu

_INV_SQRT2 = 1.0 / math.sqrt(2.0)
_F32, _BF16 = 4, 2


def _gelu_exact(h):
    # Exact (erf-based) GELU == torch.nn.GELU() default, computed in f32.
    # TODO(synk): if profiling shows VALU saturation on v5e at small dim,
    # switch to tanh-approx GELU so the transcendental lands on the EUP slot.
    return 0.5 * h * (1.0 + lax.erf(h * _INV_SQRT2))


# --------------------------------------------------------------------------- #
# Kernels
# --------------------------------------------------------------------------- #
def _ffn_kernel(x_ref, w1_ref, b1_ref, w2_ref, b2_ref, o_ref):
    """Fully-resident-weights form. x:(tm,dim), W1/W2 bf16, biases f32."""
    x = x_ref[...].astype(jnp.bfloat16)
    h = jnp.dot(x, w1_ref[...], preferred_element_type=jnp.float32) + b1_ref[...]
    h = _gelu_exact(h)
    # Dropout(p=0.0) is the identity in both train and eval -> no-op.
    out = jnp.dot(h.astype(jnp.bfloat16), w2_ref[...],
                  preferred_element_type=jnp.float32) + b2_ref[...]
    o_ref[...] = out.astype(o_ref.dtype)


def _ffn_kernel_htiled(x_ref, w1_ref, b1_ref, w2_ref, b2_ref, o_ref, acc_ref):
    """Hidden-tiled form: grid = (M tiles, H tiles); matmul-2 accumulated in f32 scratch."""
    hi = pl.program_id(1)

    @pl.when(hi == 0)
    def _():
        acc_ref[...] = jnp.zeros_like(acc_ref)

    x = x_ref[...].astype(jnp.bfloat16)
    h = jnp.dot(x, w1_ref[...], preferred_element_type=jnp.float32) + b1_ref[...]
    h = _gelu_exact(h)
    acc_ref[...] += jnp.dot(h.astype(jnp.bfloat16), w2_ref[...],
                            preferred_element_type=jnp.float32)

    @pl.when(hi == pl.num_programs(1) - 1)
    def _():
        o_ref[...] = (acc_ref[...] + b2_ref[...]).astype(o_ref.dtype)


# --------------------------------------------------------------------------- #
# Helpers
# --------------------------------------------------------------------------- #
def _round_up(v, m):
    return ((v + m - 1) // m) * m


def _vmem_capacity_bytes():
    try:
        return int(pltpu.get_tpu_info().vmem_capacity_bytes)
    except Exception:
        return 64 << 20  # conservative default (v7x per-TensorCore VMEM)


def _num_tensorcores():
    """Best-effort TensorCores-per-chip (v7x: 2; v5e/v6e: 1). Defaults to 1."""
    try:
        info = pltpu.get_tpu_info()
        for attr in ("num_cores", "core_count", "num_tensorcores", "tensorcore_count"):
            v = getattr(info, attr, None)
            if v:
                return int(v)
    except Exception:
        pass
    return 1


def _resident_spec(block_shape, index_map):
    """Single-buffer operands whose block never changes (weights/biases)."""
    try:
        return pl.BlockSpec(block_shape, index_map, pipeline_mode=pl.Buffered(1))
    except Exception:  # fall back cleanly if this JAX version lacks pipeline_mode
        return pl.BlockSpec(block_shape, index_map)


def _resident_bytes(tm, dim, hidden, x_isz, o_isz):
    return (2 * tm * dim * x_isz            # x tiles, double-buffered
            + 2 * tm * dim * o_isz          # out tiles, double-buffered
            + 2 * dim * hidden * _BF16      # W1 + W2 (full, bf16, single-buffered)
            + (hidden + dim) * _F32         # biases
            + tm * dim * _BF16              # bf16 copy of x
            + tm * hidden * _F32            # matmul-1 result / GELU (f32)
            + tm * hidden * _BF16           # bf16 copy of gelu(h)
            + tm * dim * _F32)              # matmul-2 f32 result tile


def _htiled_bytes(tm, th, dim, x_isz, o_isz):
    return (2 * tm * dim * x_isz            # x tiles, double-buffered
            + 2 * tm * dim * o_isz          # out tiles, double-buffered
            + 2 * 2 * dim * th * _BF16      # W1/W2 slices, double-buffered
            + 2 * th * _F32 + dim * _F32    # bias slices
            + tm * dim * _F32               # f32 accumulator scratch
            + tm * dim * _BF16              # bf16 copy of x
            + tm * th * _F32                # matmul-1 slice / GELU (f32)
            + tm * th * _BF16               # bf16 copy of gelu slice
            + tm * dim * _F32)              # matmul-2 f32 partial


def _adjust_tile_m_for_megacore(tile_m, m, n_tc):
    """Only on 2-TC chips: ensure >= 2 M steps and prefer an even step count."""
    if n_tc < 2:
        return tile_m
    n_m = pl.cdiv(m, tile_m)
    if n_m < 2 and m >= 128:
        return max(8, _round_up(pl.cdiv(m, 2), 8))
    if n_m > 1 and n_m % 2 == 1:
        cand = max(8, _round_up(pl.cdiv(m, n_m + 1), 8))
        if pl.cdiv(m, cand) % 2 == 0:
            return cand
    return tile_m


# --------------------------------------------------------------------------- #
# Wrapper
# --------------------------------------------------------------------------- #
def feed_forward(x, w1, b1, w2, b2, *, tile_m=None, tile_h=None, force_tiled=False):
    """x: (batch, seq, dim). w1: (dim, hidden), b1: (hidden,), w2: (hidden, dim), b2: (dim,).

    Returns (batch, seq, dim), matching torch FeedForward with dropout p=0.
    Accuracy contract: MXU inputs (x, W1, gelu(h), W2) are bf16 with f32
    accumulation; biases and the GELU itself are f32.
    """
    batch, seq, dim = x.shape
    hidden = w1.shape[1]
    m = batch * seq
    x2d = x.reshape(m, dim)
    out_dtype = x.dtype
    x_isz = jnp.dtype(x.dtype).itemsize
    o_isz = jnp.dtype(out_dtype).itemsize

    vmem_cap = _vmem_capacity_bytes()
    vmem_budget = int(0.85 * vmem_cap)   # headroom for Mosaic scratch / semaphores
    n_tc = _num_tensorcores()

    # Cast weights at most once; pass bf16 weights to skip the cast entirely.
    w1_bf = w1 if w1.dtype == jnp.bfloat16 else w1.astype(jnp.bfloat16)
    w2_bf = w2 if w2.dtype == jnp.bfloat16 else w2.astype(jnp.bfloat16)
    b1_2d = b1.reshape(1, hidden).astype(jnp.float32)
    b2_2d = b2.reshape(1, dim).astype(jnp.float32)

    m_cap = max(8, _round_up(m, 8))
    if tile_m is not None:
        tile_m = max(8, _round_up(int(tile_m), 8))

    # ---- branch decision: fully-resident weights whenever they fit ---------
    res_default = 256 if vmem_cap <= (64 << 20) else 512
    res_cands = [tile_m] if tile_m is not None else [res_default, 256, 128]
    res_tile_m = None
    for cand in dict.fromkeys(min(c, m_cap) for c in res_cands):
        if _resident_bytes(cand, dim, hidden, x_isz, o_isz) <= vmem_budget:
            res_tile_m = cand
            break
    use_tiled = force_tiled or (res_tile_m is None)

    if not use_tiled:
        # ---------------- fully-resident weights -----------------------------
        tm = _adjust_tile_m_for_megacore(res_tile_m, m, n_tc)
        n_m = pl.cdiv(m, tm)
        need = _resident_bytes(tm, dim, hidden, x_isz, o_isz)
        vmem_limit = int(min(max(need * 1.2 + (4 << 20), 16 << 20), vmem_budget))
        grid_spec = pltpu.PrefetchScalarGridSpec(
            num_scalar_prefetch=0,
            grid=(n_m,),
            in_specs=[
                pl.BlockSpec((tm, dim), lambda i: (i, 0)),        # x rows
                _resident_spec((dim, hidden), lambda i: (0, 0)),  # W1 (full, bf16)
                _resident_spec((1, hidden), lambda i: (0, 0)),    # b1
                _resident_spec((hidden, dim), lambda i: (0, 0)),  # W2 (full, bf16)
                _resident_spec((1, dim), lambda i: (0, 0)),       # b2
            ],
            out_specs=pl.BlockSpec((tm, dim), lambda i: (i, 0)),
        )
        out2d = pl.pallas_call(
            _ffn_kernel,
            out_shape=jax.ShapeDtypeStruct((m, dim), out_dtype),
            grid_spec=grid_spec,
            compiler_params=pltpu.CompilerParams(
                dimension_semantics=("parallel",),
                vmem_limit_bytes=vmem_limit,
            ),
        )(x2d, w1_bf, b1_2d, w2_bf, b2_2d)
        return out2d.reshape(batch, seq, dim)

    # ---------------- hidden-tiled (streaming weights) -----------------------
    # Intensity on weight streaming == tile_m, so pick the largest tile_m that
    # fits and shrink tile_h only down to 512 (keeps the acc RMW traffic well
    # below the single vector-store slot).
    hidden128 = _round_up(hidden, 128)
    if tile_h is not None:
        th_all = [max(128, _round_up(int(tile_h), 128))]
    else:
        th_all = [c for c in (2048, 1536, 1024, 768, 512, 384, 256, 128)
                  if c <= hidden128 and hidden128 % c == 0]
        if not th_all:
            th_all = [128]
    th_pref = [c for c in th_all if c >= 512] or th_all

    tm_cands = [tile_m] if tile_m is not None else [1024, 768, 512, 384, 256, 128, 64]
    tm_cands = list(dict.fromkeys(min(max(8, c), m_cap) for c in tm_cands))

    chosen = None
    for tm in tm_cands:
        for th in th_pref:
            if _htiled_bytes(tm, th, dim, x_isz, o_isz) <= vmem_budget:
                chosen = (tm, th)
                break
        if chosen is not None:
            break
    if chosen is None:
        chosen = (tm_cands[-1], th_all[-1])   # last resort; rely on headroom
    tm, th = chosen
    tm = _adjust_tile_m_for_megacore(tm, m, n_tc)

    hidden_pad = _round_up(hidden, th)
    if hidden_pad != hidden:
        # Zero-padding hidden is exact: gelu(x@0 + 0) == 0 contributes nothing.
        pad_h = hidden_pad - hidden
        w1_bf = jnp.pad(w1_bf, ((0, 0), (0, pad_h)))
        b1_2d = jnp.pad(b1_2d, ((0, 0), (0, pad_h)))
        w2_bf = jnp.pad(w2_bf, ((0, pad_h), (0, 0)))

    n_m = pl.cdiv(m, tm)
    n_h = hidden_pad // th
    need = _htiled_bytes(tm, th, dim, x_isz, o_isz)
    vmem_limit = int(min(max(need * 1.2 + (4 << 20), 16 << 20), vmem_budget))
    # TODO(synk): if a trace shows exposed W1/W2-slice DMA once compute-bound,
    # bump those BlockSpecs to pipeline_mode=pl.Buffered(3).
    grid_spec = pltpu.PrefetchScalarGridSpec(
        num_scalar_prefetch=0,
        grid=(n_m, n_h),                                   # reduction axis last
        in_specs=[
            pl.BlockSpec((tm, dim), lambda i, h: (i, 0)),  # x rows (reused across h)
            pl.BlockSpec((dim, th), lambda i, h: (0, h)),  # W1 slice
            pl.BlockSpec((1, th), lambda i, h: (0, h)),    # b1 slice
            pl.BlockSpec((th, dim), lambda i, h: (h, 0)),  # W2 slice
            _resident_spec((1, dim), lambda i, h: (0, 0)), # b2
        ],
        out_specs=pl.BlockSpec((tm, dim), lambda i, h: (i, 0)),
        scratch_shapes=[pltpu.VMEM((tm, dim), jnp.float32)],
    )
    out2d = pl.pallas_call(
        _ffn_kernel_htiled,
        out_shape=jax.ShapeDtypeStruct((m, dim), out_dtype),
        grid_spec=grid_spec,
        compiler_params=pltpu.CompilerParams(
            dimension_semantics=("parallel", "arbitrary"),
            vmem_limit_bytes=vmem_limit,
        ),
    )(x2d, w1_bf, b1_2d, w2_bf, b2_2d)
    return out2d.reshape(batch, seq, dim)


# --------------------------------------------------------------------------- #
# Init + references + self-test
# --------------------------------------------------------------------------- #
def init_params(key, dim, hidden_dim, dtype=jnp.float32):
    """torch.nn.Linear-style init (uniform +-1/sqrt(fan_in)); W stored as (in, out)."""
    k1, k2, k3, k4 = jax.random.split(key, 4)
    lim1 = 1.0 / math.sqrt(dim)
    lim2 = 1.0 / math.sqrt(hidden_dim)
    w1 = jax.random.uniform(k1, (dim, hidden_dim), dtype, -lim1, lim1)
    b1 = jax.random.uniform(k2, (hidden_dim,), dtype, -lim1, lim1)
    w2 = jax.random.uniform(k3, (hidden_dim, dim), dtype, -lim2, lim2)
    b2 = jax.random.uniform(k4, (dim,), dtype, -lim2, lim2)
    return w1, b1, w2, b2


def feed_forward_ref_f32(x, w1, b1, w2, b2):
    """Pure-JAX f32 reference (exact GELU, dropout p=0)."""
    h = x @ w1 + b1
    h = 0.5 * h * (1.0 + lax.erf(h * _INV_SQRT2))
    return h @ w2 + b2


def feed_forward_ref_bf16(x, w1, b1, w2, b2):
    """Reference mirroring the kernel's bf16-input / f32-accumulate MXU math."""
    h = jnp.dot(x.astype(jnp.bfloat16), w1.astype(jnp.bfloat16),
                preferred_element_type=jnp.float32) + b1
    h = 0.5 * h * (1.0 + lax.erf(h * _INV_SQRT2))
    return jnp.dot(h.astype(jnp.bfloat16), w2.astype(jnp.bfloat16),
                   preferred_element_type=jnp.float32) + b2


if __name__ == "__main__":
    key = jax.random.PRNGKey(0)
    kx, kp = jax.random.split(key)

    # Small but lane-dense shapes (dim/hidden multiples of 128 -> unmasked stores).
    batch, seq, dim, hidden_dim = 2, 8, 128, 256
    x = jax.random.normal(kx, (batch, seq, dim), jnp.float32)
    w1, b1, w2, b2 = init_params(kp, dim, hidden_dim)

    out = jax.block_until_ready(feed_forward(x, w1, b1, w2, b2))
    assert out.shape == (batch, seq, dim), out.shape
    ref_bf16 = feed_forward_ref_bf16(x, w1, b1, w2, b2)
    assert jnp.allclose(out, ref_bf16, atol=5e-3, rtol=5e-3), "mismatch vs bf16 reference"
    ref_f32 = feed_forward_ref_f32(x, w1, b1, w2, b2)
    assert jnp.allclose(out, ref_f32, atol=5e-2, rtol=5e-2), "mismatch vs f32 reference"

    # Hidden-tiled path (forced): exercises the accumulator grid + init/finalize.
    out_t = jax.block_until_ready(feed_forward(x, w1, b1, w2, b2, force_tiled=True))
    assert jnp.allclose(out_t, ref_bf16, atol=5e-3, rtol=5e-3), "mismatch (htiled path)"

    # Ragged row count: exercises masked partial M blocks (no host-side x pad).
    x_odd = jax.random.normal(kx, (3, 7, dim), jnp.float32)
    out_odd = jax.block_until_ready(feed_forward(x_odd, w1, b1, w2, b2))
    ref_odd = feed_forward_ref_bf16(x_odd, w1, b1, w2, b2)
    assert out_odd.shape == (3, 7, dim), out_odd.shape
    assert jnp.allclose(out_odd, ref_odd, atol=5e-3, rtol=5e-3), "mismatch (ragged M)"

    # Hidden not a multiple of 128 on the tiled path: zero-pad fallback (exact).
    hidden_odd = 200
    w1o, b1o, w2o, b2o = init_params(jax.random.PRNGKey(1), dim, hidden_odd)
    out_ho = jax.block_until_ready(feed_forward(x, w1o, b1o, w2o, b2o, force_tiled=True))
    ref_ho = feed_forward_ref_bf16(x, w1o, b1o, w2o, b2o)
    assert jnp.allclose(out_ho, ref_ho, atol=5e-3, rtol=5e-3), "mismatch (padded hidden)"

    print("KERNEL_OK")
</pallas_src>

<mosaic_0001>
module attributes {stable_mosaic.version = 11 : i64} {
  func.func @_ffn_kernel(%arg0: i32, %arg1: memref<16x128xf32, #tpu.memory_space<vmem>>, %arg2: memref<128x256xbf16, #tpu.memory_space<vmem>>, %arg3: memref<1x256xf32, #tpu.memory_space<vmem>>, %arg4: memref<256x128xbf16, #tpu.memory_space<vmem>>, %arg5: memref<1x128xf32, #tpu.memory_space<vmem>>, %arg6: memref<16x128xf32, #tpu.memory_space<vmem>>) attributes {dimension_semantics = [#tpu.dimension_semantics<parallel>], iteration_bounds = array<i64: 1>, scalar_prefetch = 0 : i64, scratch_operands = 0 : i64, tpu.core_type = #tpu.core_type<tc>, window_params = [{transform_indices = @transform_0, window_bounds = array<i64: 16, 128>}, {pipeline_mode = #tpu.pipeline_mode<synchronous>, transform_indices = @transform_1, window_bounds = array<i64: 128, 256>}, {pipeline_mode = #tpu.pipeline_mode<synchronous>, transform_indices = @transform_2, window_bounds = array<i64: 1, 256>}, {pipeline_mode = #tpu.pipeline_mode<synchronous>, transform_indices = @transform_3, window_bounds = array<i64: 256, 128>}, {pipeline_mode = #tpu.pipeline_mode<synchronous>, transform_indices = @transform_4, window_bounds = array<i64: 1, 128>}, {transform_indices = @transform_5, window_bounds = array<i64: 16, 128>}]} {
    %c0 = arith.constant 0 : index
    %c0_0 = arith.constant 0 : index
    %0 = vector.load %arg1[%c0, %c0_0] : memref<16x128xf32, #tpu.memory_space<vmem>>, vector<16x128xf32>
    %1 = arith.truncf %0 : vector<16x128xf32> to vector<16x128xbf16>
    %c0_1 = arith.constant 0 : index
    %c0_2 = arith.constant 0 : index
    %2 = vector.load %arg2[%c0_1, %c0_2] : memref<128x256xbf16, #tpu.memory_space<vmem>>, vector<128x256xbf16>
    %cst = arith.constant dense<0.000000e+00> : vector<16x256xf32>
    %3 = tpu.matmul %1, %2, %cst {dimension_numbers = #tpu.dot_dimension_numbers<[1], [0], [0], [1], [0, 0, 1, 1], [], []>} : vector<16x128xbf16>, vector<128x256xbf16>, vector<16x256xf32> -> vector<16x256xf32>
    %c0_3 = arith.constant 0 : index
    %c0_4 = arith.constant 0 : index
    %4 = vector.load %arg3[%c0_3, %c0_4] : memref<1x256xf32, #tpu.memory_space<vmem>>, vector<1x256xf32>
    %5 = vector.broadcast %4 : vector<1x256xf32> to vector<16x256xf32>
    %6 = arith.addf %3, %5 : vector<16x256xf32>
    %cst_5 = arith.constant 5.000000e-01 : f32
    %7 = vector.broadcast %cst_5 : f32 to vector<16x256xf32>
    %8 = arith.mulf %7, %6 : vector<16x256xf32>
    %cst_6 = arith.constant 0.707106769 : f32
    %9 = vector.broadcast %cst_6 : f32 to vector<16x256xf32>
    %10 = arith.mulf %6, %9 : vector<16x256xf32>
    %11 = math.erf %10 : vector<16x256xf32>
    %cst_7 = arith.constant 1.000000e+00 : f32
    %12 = vector.broadcast %cst_7 : f32 to vector<16x256xf32>
    %13 = arith.addf %12, %11 : vector<16x256xf32>
    %14 = arith.mulf %8, %13 : vector<16x256xf32>
    %15 = arith.truncf %14 : vector<16x256xf32> to vector<16x256xbf16>
    %c0_8 = arith.constant 0 : index
    %c0_9 = arith.constant 0 : index
    %16 = vector.load %arg4[%c0_8, %c0_9] : memref<256x128xbf16, #tpu.memory_space<vmem>>, vector<256x128xbf16>
    %cst_10 = arith.constant dense<0.000000e+00> : vector<16x128xf32>
    %17 = tpu.matmul %15, %16, %cst_10 {dimension_numbers = #tpu.dot_dimension_numbers<[1], [0], [0], [1], [0, 0, 1, 1], [], []>} : vector<16x256xbf16>, vector<256x128xbf16>, vector<16x128xf32> -> vector<16x128xf32>
    %c0_11 = arith.constant 0 : index
    %c0_12 = arith.constant 0 : index
    %18 = vector.load %arg5[%c0_11, %c0_12] : memref<1x128xf32, #tpu.memory_space<vmem>>, vector<1x128xf32>
    %19 = vector.broadcast %18 : vector<1x128xf32> to vector<16x128xf32>
    %20 = arith.addf %17, %19 : vector<16x128xf32>
    %c0_13 = arith.constant 0 : index
    %c0_14 = arith.constant 0 : index
    %21 = vector.load %arg6[%c0_13, %c0_14] : memref<16x128xf32, #tpu.memory_space<vmem>>, vector<16x128xf32>
    tpu.vector_store %arg6[%c0_13, %c0_14], %20 {strides = array<i32>} : memref<16x128xf32, #tpu.memory_space<vmem>>, vector<16x128xf32>,
    return
  }
  func.func @transform_0(%arg0: i32) -> (i32, i32) {
    %c0_i32 = arith.constant 0 : i32
    %c0_i32_0 = arith.constant 0 : i32
    return %arg0, %c0_i32 : i32, i32
  }
  func.func @transform_1(%arg0: i32) -> (i32, i32) {
    %c0_i32 = arith.constant 0 : i32
    %c0_i32_0 = arith.constant 0 : i32
    %c0_i32_1 = arith.constant 0 : i32
    return %c0_i32, %c0_i32_0 : i32, i32
  }
  func.func @transform_2(%arg0: i32) -> (i32, i32) {
    %c0_i32 = arith.constant 0 : i32
    %c0_i32_0 = arith.constant 0 : i32
    %c0_i32_1 = arith.constant 0 : i32
    return %c0_i32, %c0_i32_0 : i32, i32
  }
  func.func @transform_3(%arg0: i32) -> (i32, i32) {
    %c0_i32 = arith.constant 0 : i32
    %c0_i32_0 = arith.constant 0 : i32
    %c0_i32_1 = arith.constant 0 : i32
    return %c0_i32, %c0_i32_0 : i32, i32
  }
  func.func @transform_4(%arg0: i32) -> (i32, i32) {
    %c0_i32 = arith.constant 0 : i32
    %c0_i32_0 = arith.constant 0 : i32
    %c0_i32_1 = arith.constant 0 : i32
    return %c0_i32, %c0_i32_0 : i32, i32
  }
  func.func @transform_5(%arg0: i32) -> (i32, i32) {
    %c0_i32 = arith.constant 0 : i32
    %c0_i32_0 = arith.constant 0 : i32
    return %arg0, %c0_i32 : i32, i32
  }
}

</mosaic_0001>

<llo_original>
// kernel: tpu_custom_call.1
$region0: #{tpu_custom_call.1}
  #allocation0 [shape = 'u32[]', space=smem, size = 0x4, offset = 0x4, fixed_abs, tag = 'smem constant byte address 0x4 - core index']
  #allocation1 [shape = 'u32[144,128]{1,0:T(1,128)}', space=vmem, size = 0x12000, scoped, tag = 'internal scratch']
  %s0 = inlined_call_operand.hbm [shape: f32[16,128], index: 0, kind: input, shape index: {}]
  %s1 = inlined_call_operand.hbm [shape: bf16[128,256], index: 1, kind: input, shape index: {}]
  %s2 = inlined_call_operand.vmem [shape: f32[1,256], index: 2, kind: input, shape index: {}]
  %s3 = inlined_call_operand.hbm [shape: bf16[256,128], index: 3, kind: input, shape index: {}]
  %s4 = inlined_call_operand.vmem [shape: f32[1,128], index: 4, kind: input, shape index: {}]
  %s5 = inlined_call_operand.hbm [shape: f32[16,128], index: 5, kind: output, shape index: {}]
  %s6 = sld [smem:[#allocation0]]
  $region42: #{tpu_custom_call.1} parent=0
    _
  %s8 = ssub.s32 1, %s6
  %s9 = scalar_select 0, %s8, %s6
  $region1: #{tpu_custom_call.1} parent=0
    #allocation2 [shape = 'u8[8192]{0}', space=vmem, size = 0x2000, scoped, tag = 'input window, operand 0, single buffered']
    #allocation3 [shape = 's32[1]{0}', space=sflag, size = 0x4, scoped, tag = 'scoped memory for tpu_custom_call.1']
    #allocation4 [shape = 's32[1]{0}', space=sflag, size = 0x4, scoped, tag = 'scoped memory for tpu_custom_call.1']
    #allocation5 [shape = 'u8[65536]{0}', space=vmem, size = 0x10000, scoped, tag = 'input window, operand 1, single buffered']
    #allocation6 [shape = 's32[1]{0}', space=sflag, size = 0x4, scoped, tag = 'scoped memory for tpu_custom_call.1']
    #allocation7 [shape = 'u8[65536]{0}', space=vmem, size = 0x10000, scoped, tag = 'input window, operand 3, single buffered']
    #allocation8 [shape = 'u8[8192]{0}', space=vmem, size = 0x2000, scoped, tag = 'output window, operand 0, single buffered']
    %10 = vsyncpa [#allocation3], 0
    %11 = vsyncpa [#allocation6], 0
    %12 = vsyncpa [#allocation4], 0
    // Predicated region
    $region2: #{tpu_custom_call.1} parent=1 // pred_check
      _
    $region3: #{tpu_custom_call.1} parent=1 // pred_check_branch
      %14 = sbr.rel (0) target = $region5
    $region4: #{tpu_custom_call.1} parent=1 // pred_region
      %s16 = ssub.s32 256, 256
      %17 = vsyncadd [#allocation3], %s16
      %s18 = sshll.u32 [#allocation2], 4
      %s19 = int_to_ptr.vmem [resolvable:$true] %s18
      %24 = dma.hbm_to_vmem [thread:$0]  %s0, 256, %s19, [#allocation3], 128, 128, 8
    $region5: #{tpu_custom_call.1} parent=1 // pred_fallthru
      _
    // Predicated region
    $region6: #{tpu_custom_call.1} parent=1 // pred_check
      _
    $region7: #{tpu_custom_call.1} parent=1 // pred_check_branch
      %26 = sbr.rel (0) target = $region9
    $region8: #{tpu_custom_call.1} parent=1 // pred_region
      %s28 = ssub.s32 2048, 2048
      %29 = vsyncadd [#allocation6], %s28
      %s30 = sshll.u32 [#allocation5], 4
      %s31 = int_to_ptr.vmem [resolvable:$true] %s30
      %36 = dma.hbm_to_vmem [thread:$0]  %s1, 2048, %s31, [#allocation6], 128, 128, 8
    $region9: #{tpu_custom_call.1} parent=1 // pred_fallthru
      _
    // Predicated region
    $region10: #{tpu_custom_call.1} parent=1 // pred_check
      _
    $region11: #{tpu_custom_call.1} parent=1 // pred_check_branch
      %38 = sbr.rel (0) target = $region13
    $region12: #{tpu_custom_call.1} parent=1 // pred_region
      _
    $region13: #{tpu_custom_call.1} parent=1 // pred_fallthru
      _
    // Predicated region
    $region14: #{tpu_custom_call.1} parent=1 // pred_check
      _
    $region15: #{tpu_custom_call.1} parent=1 // pred_check_branch
      %40 = sbr.rel (0) target = $region17
    $region16: #{tpu_custom_call.1} parent=1 // pred_region
      %s42 = ssub.s32 2048, 2048
      %43 = vsyncadd [#allocation6], %s42
      %s44 = sshll.u32 [#allocation7], 4
      %s45 = int_to_ptr.vmem [resolvable:$true] %s44
      %50 = dma.hbm_to_vmem [thread:$0]  %s3, 2048, %s45, [#allocation6], 64, 64, 4
    $region17: #{tpu_custom_call.1} parent=1 // pred_fallthru
      _
    // Predicated region
    $region18: #{tpu_custom_call.1} parent=1 // pred_check
      _
    $region19: #{tpu_custom_call.1} parent=1 // pred_check_branch
      %52 = sbr.rel (0) target = $region21
    $region20: #{tpu_custom_call.1} parent=1 // pred_region
      _
    $region21: #{tpu_custom_call.1} parent=1 // pred_fallthru
      _
    // Predicated region
    $region22: #{tpu_custom_call.1} parent=1 // pred_check
      _
    $region23: #{tpu_custom_call.1} parent=1 // pred_check_branch
      %54 = sbr.rel (0) target = $region25
    $region24: #{tpu_custom_call.1} parent=1 // pred_region
      %55 = dma.done [#allocation3], 256
    $region25: #{tpu_custom_call.1} parent=1 // pred_fallthru
      _
    // Predicated region
    $region26: #{tpu_custom_call.1} parent=1 // pred_check
      _
    $region27: #{tpu_custom_call.1} parent=1 // pred_check_branch
      %57 = sbr.rel (0) target = $region29
    $region28: #{tpu_custom_call.1} parent=1 // pred_region
      %58 = dma.done [#allocation6], 2048
    $region29: #{tpu_custom_call.1} parent=1 // pred_fallthru
      _
    // Predicated region
    $region30: #{tpu_custom_call.1} parent=1 // pred_check
      _
    $region31: #{tpu_custom_call.1} parent=1 // pred_check_branch
      %60 = sbr.rel (0) target = $region33
    $region32: #{tpu_custom_call.1} parent=1 // pred_region
      %61 = dma.done [#allocation6], 2048
    $region33: #{tpu_custom_call.1} parent=1 // pred_fallthru
      _
    %v63 = vld [vmem:[#allocation2] sm:$0xff]
    %v64 = vld [vmem:[#allocation2 + $0x8] sm:$0xff]
    %v65 = vpack.c.bf16 %v64, %v63
    %v66 = vld [vmem:[#allocation5] sm:$0xff]
    %v67 = vld [vmem:[#allocation5 + $0x8] sm:$0xff]
    %v68 = vld [vmem:[#allocation5 + $0x10] sm:$0xff]
    %v69 = vld [vmem:[#allocation5 + $0x18] sm:$0xff]
    %v70 = vld [vmem:[#allocation5 + $0x20] sm:$0xff]
    %v71 = vld [vmem:[#allocation5 + $0x28] sm:$0xff]
    %v72 = vld [vmem:[#allocation5 + $0x30] sm:$0xff]
    %v73 = vld [vmem:[#allocation5 + $0x38] sm:$0xff]
    %v74 = vld [vmem:[#allocation5 + $0x40] sm:$0xff]
    %v75 = vld [vmem:[#allocation5 + $0x48] sm:$0xff]
    %v76 = vld [vmem:[#allocation5 + $0x50] sm:$0xff]
    %v77 = vld [vmem:[#allocation5 + $0x58] sm:$0xff]
    %v78 = vld [vmem:[#allocation5 + $0x60] sm:$0xff]
    %v79 = vld [vmem:[#allocation5 + $0x68] sm:$0xff]
    %v80 = vld [vmem:[#allocation5 + $0x70] sm:$0xff]
    %v81 = vld [vmem:[#allocation5 + $0x78] sm:$0xff]
    %v82 = vld [vmem:[%s2] sm:$0x3]
    %v84 = vlaneseq
    %v85 = vshrl.u32 %v84, 7
    %v86 = vsub.s32 0, %v85
    %v87 = vrot.slane %v82, %v86
    %v88 = vlaneseq
    %v89 = vshrl.u32 %v88, 7
    %v90 = vsub.s32 1, %v89
    %v91 = vrot.slane %v82, %v90
    %v110 = vunpack.c.l.b16 %v66
    %v111 = vunpack.c.h.b16 %v66
    %v112 = vunpack.c.l.b16 %v67
    %v113 = vunpack.c.h.b16 %v67
    %v114 = vunpack.c.l.b16 %v68
    %v115 = vunpack.c.h.b16 %v68
    %v116 = vunpack.c.l.b16 %v69
    %v117 = vunpack.c.h.b16 %v69
    %v118 = vunpack.c.l.b16 %v70
    %v119 = vunpack.c.h.b16 %v70
    %v120 = vunpack.c.l.b16 %v71
    %v121 = vunpack.c.h.b16 %v71
    %v122 = vunpack.c.l.b16 %v72
    %v123 = vunpack.c.h.b16 %v72
    %v124 = vunpack.c.l.b16 %v73
    %v125 = vunpack.c.h.b16 %v73
    %v126 = vunpack.c.l.b16 %v74
    %v127 = vunpack.c.h.b16 %v74
    %v128 = vunpack.c.l.b16 %v75
    %v129 = vunpack.c.h.b16 %v75
    %v130 = vunpack.c.l.b16 %v76
    %v131 = vunpack.c.h.b16 %v76
    %v132 = vunpack.c.l.b16 %v77
    %v133 = vunpack.c.h.b16 %v77
    %v134 = vunpack.c.l.b16 %v78
    %v135 = vunpack.c.h.b16 %v78
    %v136 = vunpack.c.l.b16 %v79
    %v137 = vunpack.c.h.b16 %v79
    %v138 = vunpack.c.l.b16 %v80
    %v139 = vunpack.c.h.b16 %v80
    %v140 = vunpack.c.l.b16 %v81
    %v141 = vunpack.c.h.b16 %v81
    %v142 = vpack.c.b16 %v112, %v110
    %v143 = vpack.c.b16 %v113, %v111
    %v144 = vpack.c.b16 %v116, %v114
    %v145 = vpack.c.b16 %v117, %v115
    %v146 = vpack.c.b16 %v120, %v118
    %v147 = vpack.c.b16 %v121, %v119
    %v148 = vpack.c.b16 %v124, %v122
    %v149 = vpack.c.b16 %v125, %v123
    %v150 = vpack.c.b16 %v128, %v126
    %v151 = vpack.c.b16 %v129, %v127
    %v152 = vpack.c.b16 %v132, %v130
    %v153 = vpack.c.b16 %v133, %v131
    %v154 = vpack.c.b16 %v136, %v134
    %v155 = vpack.c.b16 %v137, %v135
    %v156 = vpack.c.b16 %v140, %v138
    %v157 = vpack.c.b16 %v141, %v139
    %174 = vmatprep.subr.bf16.mxu0 %v143
    %175 = vmatpush1.bf16.msra.mxu0 %v142
    %176 = vmatprep.subr.bf16.mxu0 %v145
    %177 = vmatpush1.bf16.msra.mxu0 %v144
    %178 = vmatprep.subr.bf16.mxu0 %v147
    %179 = vmatpush1.bf16.msra.mxu0 %v146
    %180 = vmatprep.subr.bf16.mxu0 %v149
    %181 = vmatpush1.bf16.msra.mxu0 %v148
    %182 = vmatprep.subr.bf16.mxu0 %v151
    %183 = vmatpush1.bf16.msra.mxu0 %v150
    %184 = vmatprep.subr.bf16.mxu0 %v153
    %185 = vmatpush1.bf16.msra.mxu0 %v152
    %186 = vmatprep.subr.bf16.mxu0 %v155
    %187 = vmatpush1.bf16.msra.mxu0 %v154
    %188 = vmatprep.subr.bf16.mxu0 %v157
    %189 = vmatpush1.bf16.msra.mxu0 %v156
    %190 = vmatprep.subr.bf16.mxu0 0
    %191 = vmatpush1.bf16.msra.mxu0 0
    %192 = vmatprep.subr.bf16.mxu0 0
    %193 = vmatpush1.bf16.msra.mxu0 0
    %194 = vmatprep.subr.bf16.mxu0 0
    %195 = vmatpush1.bf16.msra.mxu0 0
    %196 = vmatprep.subr.bf16.mxu0 0
    %197 = vmatpush1.bf16.msra.mxu0 0
    %198 = vmatprep.subr.bf16.mxu0 0
    %199 = vmatpush1.bf16.msra.mxu0 0
    %200 = vmatprep.subr.bf16.mxu0 0
    %201 = vmatpush1.bf16.msra.mxu0 0
    %202 = vmatprep.subr.bf16.mxu0 0
    %203 = vmatpush1.bf16.msra.mxu0 0
    %204 = vmatprep.subr.bf16.mxu0 0
    %205 = vmatpush1.bf16.msra.mxu0 0
    %206 = vmatprep.mubr.bf16.mxu0 0
    %207 = vmatmul.mubr.bf16.gmra.mrb[0].mxu0 %v65
    %v208 = vpop.f32.mrb[0].mxu0
    %v209 = vadd.f32 %v87, %v208
    %v210 = vpop.f32.mrb[0].mxu0
    %v211 = vadd.f32 %v91, %v210
    %v212 = vpop.f32.mrb[0].mxu0
    %v213 = vadd.f32 %v87, %v212
    %v214 = vpop.f32.mrb[0].mxu0
    %v215 = vadd.f32 %v91, %v214
    %216 = vdwg.mxu0
    %v217 = vmul.f32 %v209, 0.5
    %v218 = vmul.f32 %v211, 0.5
    %v219 = vmul.f32 %v213, 0.5
    %v220 = vmul.f32 %v215, 0.5
    %v221 = vmul.f32 %v209, 0.70710677
    %v222 = vmul.f32 %v211, 0.70710677
    %v223 = vmul.f32 %v213, 0.70710677
    %v224 = vmul.f32 %v215, 0.70710677
    %v225 = verf.f32.pop %v221
    %v226 = verf.f32.pop %v222
    %v227 = verf.f32.pop %v223
    %v228 = verf.f32.pop %v224
    %v229 = vadd.f32 %v225, 1.0
    %v230 = vadd.f32 %v226, 1.0
    %v231 = vadd.f32 %v227, 1.0
    %v232 = vadd.f32 %v228, 1.0
    %v233 = vmul.f32 %v217, %v229
    %v234 = vmul.f32 %v218, %v230
    %v235 = vmul.f32 %v219, %v231
    %v236 = vmul.f32 %v220, %v232
    %v237 = vpack.c.bf16 %v235, %v233
    %v238 = vpack.c.bf16 %v236, %v234
    %v239 = vld [vmem:[#allocation7] sm:$0xf]
    %v240 = vld [vmem:[#allocation7 + $0x4] sm:$0xf]
    %v241 = vld [vmem:[#allocation7 + $0x8] sm:$0xf]
    %v242 = vld [vmem:[#allocation7 + $0xc] sm:$0xf]
    %v243 = vld [vmem:[#allocation7 + $0x10] sm:$0xf]
    %v244 = vld [vmem:[#allocation7 + $0x14] sm:$0xf]
    %v245 = vld [vmem:[#allocation7 + $0x18] sm:$0xf]
    %v246 = vld [vmem:[#allocation7 + $0x1c] sm:$0xf]
    %v247 = vld [vmem:[#allocation7 + $0x20] sm:$0xf]
    %v248 = vld [vmem:[#allocation7 + $0x24] sm:$0xf]
    %v249 = vld [vmem:[#allocation7 + $0x28] sm:$0xf]
    %v250 = vld [vmem:[#allocation7 + $0x2c] sm:$0xf]
    %v251 = vld [vmem:[#allocation7 + $0x30] sm:$0xf]
    %v252 = vld [vmem:[#allocation7 + $0x34] sm:$0xf]
    %v253 = vld [vmem:[#allocation7 + $0x38] sm:$0xf]
    %v254 = vld [vmem:[#allocation7 + $0x3c] sm:$0xf]
    %v255 = vld [vmem:[#allocation7 + $0x40] sm:$0xf]
    %v256 = vld [vmem:[#allocation7 + $0x44] sm:$0xf]
    %v257 = vld [vmem:[#allocation7 + $0x48] sm:$0xf]
    %v258 = vld [vmem:[#allocation7 + $0x4c] sm:$0xf]
    %v259 = vld [vmem:[#allocation7 + $0x50] sm:$0xf]
    %v260 = vld [vmem:[#allocation7 + $0x54] sm:$0xf]
    %v261 = vld [vmem:[#allocation7 + $0x58] sm:$0xf]
    %v262 = vld [vmem:[#allocation7 + $0x5c] sm:$0xf]
    %v263 = vld [vmem:[#allocation7 + $0x60] sm:$0xf]
    %v264 = vld [vmem:[#allocation7 + $0x64] sm:$0xf]
    %v265 = vld [vmem:[#allocation7 + $0x68] sm:$0xf]
    %v266 = vld [vmem:[#allocation7 + $0x6c] sm:$0xf]
    %v267 = vld [vmem:[#allocation7 + $0x70] sm:$0xf]
    %v268 = vld [vmem:[#allocation7 + $0x74] sm:$0xf]
    %v269 = vld [vmem:[#allocation7 + $0x78] sm:$0xf]
    %v270 = vld [vmem:[#allocation7 + $0x7c] sm:$0xf]
    %v271 = vld [vmem:[%s4] sm:$0x1]
    %v273 = vlaneseq
    %v274 = vshrl.u32 %v273, 7
    %v275 = vsub.s32 0, %v274
    %v276 = vrot.slane %v271, %v275
    %v310 = vunpack.c.l.b16 %v239
    %v311 = vunpack.c.l.b16 %v240
    %v312 = vunpack.c.l.b16 %v241
    %v313 = vunpack.c.l.b16 %v242
    %v314 = vunpack.c.l.b16 %v243
    %v315 = vunpack.c.l.b16 %v244
    %v316 = vunpack.c.l.b16 %v245
    %v317 = vunpack.c.l.b16 %v246
    %v318 = vunpack.c.l.b16 %v247
    %v319 = vunpack.c.l.b16 %v248
    %v320 = vunpack.c.l.b16 %v249
    %v321 = vunpack.c.l.b16 %v250
    %v322 = vunpack.c.l.b16 %v251
    %v323 = vunpack.c.l.b16 %v252
    %v324 = vunpack.c.l.b16 %v253
    %v325 = vunpack.c.l.b16 %v254
    %v326 = vunpack.c.l.b16 %v255
    %v327 = vunpack.c.l.b16 %v256
    %v328 = vunpack.c.l.b16 %v257
    %v329 = vunpack.c.l.b16 %v258
    %v330 = vunpack.c.l.b16 %v259
    %v331 = vunpack.c.l.b16 %v260
    %v332 = vunpack.c.l.b16 %v261
    %v333 = vunpack.c.l.b16 %v262
    %v334 = vunpack.c.l.b16 %v263
    %v335 = vunpack.c.l.b16 %v264
    %v336 = vunpack.c.l.b16 %v265
    %v337 = vunpack.c.l.b16 %v266
    %v338 = vunpack.c.l.b16 %v267
    %v339 = vunpack.c.l.b16 %v268
    %v340 = vunpack.c.l.b16 %v269
    %v341 = vunpack.c.l.b16 %v270
    %v342 = vpack.c.b16 %v311, %v310
    %v343 = vpack.c.b16 %v313, %v312
    %v344 = vpack.c.b16 %v315, %v314
    %v345 = vpack.c.b16 %v317, %v316
    %v346 = vpack.c.b16 %v319, %v318
    %v347 = vpack.c.b16 %v321, %v320
    %v348 = vpack.c.b16 %v323, %v322
    %v349 = vpack.c.b16 %v325, %v324
    %v350 = vpack.c.b16 %v327, %v326
    %v351 = vpack.c.b16 %v329, %v328
    %v352 = vpack.c.b16 %v331, %v330
    %v353 = vpack.c.b16 %v333, %v332
    %v354 = vpack.c.b16 %v335, %v334
    %v355 = vpack.c.b16 %v337, %v336
    %v356 = vpack.c.b16 %v339, %v338
    %v357 = vpack.c.b16 %v341, %v340
    %374 = vmatprep.subr.bf16.mxu0 0
    %375 = vmatpush1.bf16.msra.mxu0 %v342
    %376 = vmatprep.subr.bf16.mxu0 0
    %377 = vmatpush1.bf16.msra.mxu0 %v343
    %378 = vmatprep.subr.bf16.mxu0 0
    %379 = vmatpush1.bf16.msra.mxu0 %v344
    %380 = vmatprep.subr.bf16.mxu0 0
    %381 = vmatpush1.bf16.msra.mxu0 %v345
    %382 = vmatprep.subr.bf16.mxu0 0
    %383 = vmatpush1.bf16.msra.mxu0 %v346
    %384 = vmatprep.subr.bf16.mxu0 0
    %385 = vmatpush1.bf16.msra.mxu0 %v347
    %386 = vmatprep.subr.bf16.mxu0 0
    %387 = vmatpush1.bf16.msra.mxu0 %v348
    %388 = vmatprep.subr.bf16.mxu0 0
    %389 = vmatpush1.bf16.msra.mxu0 %v349
    %390 = vmatprep.subr.bf16.mxu0 0
    %391 = vmatpush1.bf16.msra.mxu0 %v350
    %392 = vmatprep.subr.bf16.mxu0 0
    %393 = vmatpush1.bf16.msra.mxu0 %v351
    %394 = vmatprep.subr.bf16.mxu0 0
    %395 = vmatpush1.bf16.msra.mxu0 %v352
    %396 = vmatprep.subr.bf16.mxu0 0
    %397 = vmatpush1.bf16.msra.mxu0 %v353
    %398 = vmatprep.subr.bf16.mxu0 0
    %399 = vmatpush1.bf16.msra.mxu0 %v354
    %400 = vmatprep.subr.bf16.mxu0 0
    %401 = vmatpush1.bf16.msra.mxu0 %v355
    %402 = vmatprep.subr.bf16.mxu0 0
    %403 = vmatpush1.bf16.msra.mxu0 %v356
    %404 = vmatprep.subr.bf16.mxu0 0
    %405 = vmatpush1.bf16.msra.mxu0 %v357
    %406 = vmatprep.mubr.bf16.mxu0 %v238
    %407 = vmatmul.mubr.bf16.gmra.mrb[0].mxu0 %v237
    %v408 = vpop.f32.mrb[0].mxu0
    %v409 = vadd.f32 %v276, %v408
    %v410 = vpop.f32.mrb[0].mxu0
    %v411 = vpop.f32.mrb[0].mxu0
    %v412 = vadd.f32 %v276, %v411
    %v413 = vpop.f32.mrb[0].mxu0
    %414 = vdwg.mxu0
    %415 = vst [vmem:[#allocation8] sm:$0xff] %v409
    %416 = vst [vmem:[#allocation8 + $0x8] sm:$0xff] %v412
    // Predicated region
    $region34: #{tpu_custom_call.1} parent=1 // pred_check
      _
    $region35: #{tpu_custom_call.1} parent=1 // pred_check_branch
      %418 = sbr.rel (0) target = $region37
    $region36: #{tpu_custom_call.1} parent=1 // pred_region
      %s420 = ssub.s32 256, 256
      %421 = vsyncadd [#allocation4], %s420
      %s422 = sshll.u32 [#allocation8], 4
      %s423 = int_to_ptr.vmem [resolvable:$true] %s422
      %428 = dma.vmem_to_hbm [thread:$0]  %s423, 256, %s5, [#allocation4], 128, 128, 8
    $region37: #{tpu_custom_call.1} parent=1 // pred_fallthru
      _
    // Predicated region
    $region38: #{tpu_custom_call.1} parent=1 // pred_check
      _
    $region39: #{tpu_custom_call.1} parent=1 // pred_check_branch
      %430 = sbr.rel (0) target = $region41
    $region40: #{tpu_custom_call.1} parent=1 // pred_region
      %431 = dma.done [#allocation4], 256
    $region41: #{tpu_custom_call.1} parent=1 // pred_fallthru
      _
    %432 = vsyncpa [#allocation3], 1
    %433 = vsyncpa [#allocation6], 1
    %434 = vsyncpa [#allocation4], 1

</llo_original>
